<compile_context>
chip_gen: v6e
topology: v6e:2x2x1
jax: 0.10.0
libtpu: 0.0.40
codegen_flags: <defaults>
</compile_context>

<pallas_src>
import functools
import math

import jax
import jax.numpy as jnp
from jax.experimental import pallas as pl
from jax.experimental.pallas import tpu as pltpu


def _round_up(v, m):
    return (v + m - 1) // m * m


# ---------------------------------------------------------------------------
# Stage 1: support = dropout(x) @ W   (computed exactly once, stored as bf16)
# ---------------------------------------------------------------------------
def _support_kernel(seed_ref, x_ref, w_ref, s_ref, *, dropout):
    x = x_ref[...]                                        # (tm, Fin_p) bf16
    if dropout > 0.0:
        # Per-row-tile seed; each x row is masked exactly once (stage 1 visits
        # every row tile once), matching single-pass F.dropout(training=True).
        pltpu.prng_seed(seed_ref[0] + pl.program_id(0))
        bits = pltpu.bitcast(pltpu.prng_random_bits(x.shape), jnp.uint32)
        thresh = jnp.uint32(min(int(round(dropout * (1 << 32))), (1 << 32) - 1))
        keep = bits >= thresh                             # P(keep) = 1 - p
        scale = jnp.asarray(1.0 / (1.0 - dropout), dtype=x.dtype)
        x = jnp.where(keep, x * scale, jnp.zeros_like(x))
    s_ref[...] = jnp.dot(
        x, w_ref[...], preferred_element_type=jnp.float32).astype(s_ref.dtype)


# ---------------------------------------------------------------------------
# Stage 2: out_tile = tanh(adj_tile @ support)   (dominant O(N^2) MXU work)
# ---------------------------------------------------------------------------
def _adj_matmul_kernel(adj_ref, s_ref, o_ref):
    out = jnp.dot(adj_ref[...], s_ref[...], preferred_element_type=jnp.float32)
    o_ref[...] = jnp.tanh(out).astype(o_ref.dtype)


def _vmem_limit_bytes():
    try:
        cap = int(pltpu.get_tpu_info().vmem_capacity_bytes)
    except Exception:
        cap = 64 << 20
    # ~96 MiB on the 128-MiB parts (v5e/v6e), ~48 MiB on v7x (64 MiB physical).
    return int(min(96 << 20, max(32 << 20, cap * 3 // 4)))


def _pick_tile_m(n, tile_m, adj_budget_bytes):
    def npad(t):
        return _round_up(n, t)

    tm = max(16, (min(int(tile_m), _round_up(n, 16)) // 16) * 16)
    # Double-buffered bf16 adj row tile costs 2 * tm * n_p * 2 bytes.
    while tm > 16 and 4 * tm * npad(tm) > adj_budget_bytes:
        tm = max(16, ((tm // 2) // 16) * 16)
    # Prefer an even number (>= 2) of row tiles so both v7x cores get work.
    while tm > 16 and (npad(tm) // tm) % 2 != 0:
        tm = max(16, ((tm // 2) // 16) * 16)
    return tm


def gcn_layer(x, w, adj, *, dropout=0.0, seed=0, tile_m=512):
    n, f_in = x.shape
    f_in_w, f_out = w.shape
    assert f_in == f_in_w
    assert adj.shape == (n, n)

    f_in_p = _round_up(f_in, 128)
    f_out_p = _round_up(f_out, 128)

    vmem_limit = _vmem_limit_bytes()
    tm = _pick_tile_m(n, tile_m, adj_budget_bytes=vmem_limit // 2)
    n_p = _round_up(n, tm)
    grid_m = n_p // tm

    bf16 = jnp.bfloat16
    # Zero padding: padded x rows / adj rows+cols / W cols contribute nothing
    # to the real output rows; padded output rows/cols are sliced off below.
    if n_p == n and f_in_p == f_in:
        xb = x.astype(bf16)
    else:
        xb = jnp.zeros((n_p, f_in_p), bf16).at[:n, :f_in].set(x.astype(bf16))
    if f_in_p == f_in and f_out_p == f_out:
        wb = w.astype(bf16)
    else:
        wb = jnp.zeros((f_in_p, f_out_p), bf16).at[:f_in, :f_out].set(
            w.astype(bf16))
    # adj: skip the expensive padded N^2 HBM copy when n is already tile-aligned.
    if n_p == n:
        ab = adj.astype(bf16)
    else:
        ab = jnp.zeros((n_p, n_p), bf16).at[:n, :n].set(adj.astype(bf16))

    seed_arr = jnp.array([seed], dtype=jnp.int32)
    compiler_params = pltpu.CompilerParams(
        dimension_semantics=("parallel",),
        vmem_limit_bytes=vmem_limit,
    )

    # ---- Stage 1: support = dropout(x) @ W, computed once, stored bf16 -----
    support = pl.pallas_call(
        functools.partial(_support_kernel, dropout=float(dropout)),
        out_shape=jax.ShapeDtypeStruct((n_p, f_out_p), bf16),
        grid_spec=pltpu.PrefetchScalarGridSpec(
            num_scalar_prefetch=1,
            grid=(grid_m,),
            in_specs=[
                # x: one row tile per grid step, pipelined from HBM.
                pl.BlockSpec((tm, f_in_p), lambda i, seed: (i, 0)),
                # W: resident; constant index map needs only a single buffer.
                pl.BlockSpec((f_in_p, f_out_p), lambda i, seed: (0, 0),
                             pipeline_mode=pl.Buffered(1)),
            ],
            out_specs=pl.BlockSpec((tm, f_out_p), lambda i, seed: (i, 0)),
        ),
        compiler_params=compiler_params,
    )(seed_arr, xb, wb)

    # ---- Stage 2: out = tanh(adj @ support), adj row tiles pipelined -------
    out_p = pl.pallas_call(
        _adj_matmul_kernel,
        out_shape=jax.ShapeDtypeStruct((n_p, f_out_p), jnp.float32),
        grid_spec=pltpu.PrefetchScalarGridSpec(
            num_scalar_prefetch=0,
            grid=(grid_m,),
            in_specs=[
                # adj: one (tm, n_p) row tile per step -> the only per-step HBM
                # traffic; kernel is adj-bandwidth bound by design.
                pl.BlockSpec((tm, n_p), lambda i: (i, 0)),
                # support: resident bf16, single buffer.
                pl.BlockSpec((n_p, f_out_p), lambda i: (0, 0),
                             pipeline_mode=pl.Buffered(1)),
            ],
            out_specs=pl.BlockSpec((tm, f_out_p), lambda i: (i, 0)),
        ),
        compiler_params=compiler_params,
    )(ab, support)

    return out_p[:n, :f_out]


def xavier_uniform(key, in_features, out_features):
    # matches torch.nn.init.xavier_uniform on an (in_features, out_features) tensor
    bound = math.sqrt(6.0 / (in_features + out_features))
    return jax.random.uniform(key, (in_features, out_features),
                              dtype=jnp.float32, minval=-bound, maxval=bound)


if __name__ == "__main__":
    key = jax.random.PRNGKey(0)
    k_x, k_adj, k_w = jax.random.split(key, 3)

    N = 64          # number of graph nodes
    F_IN = 32       # in_features
    F_OUT = 16      # out_features
    DROPOUT = 0.0   # module default; F.dropout with p=0 is the identity

    x = jax.random.normal(k_x, (N, F_IN), dtype=jnp.float32)
    # symmetric, row-normalized-ish dense adjacency (spmm operand as dense)
    a = (jax.random.uniform(k_adj, (N, N)) < 0.1).astype(jnp.float32)
    adj = a + a.T + jnp.eye(N, dtype=jnp.float32)
    adj = adj / jnp.maximum(adj.sum(axis=1, keepdims=True), 1.0)

    W = xavier_uniform(k_w, F_IN, F_OUT)

    out = gcn_layer(x, W, adj, dropout=DROPOUT, seed=0)
    out = jax.block_until_ready(out)

    # Reference at matched precision (bf16 operands, f32 accumulation,
    # bf16-rounded intermediate `support`), dropout=0 path.
    xb = x.astype(jnp.bfloat16).astype(jnp.float32)
    wb = W.astype(jnp.bfloat16).astype(jnp.float32)
    ab = adj.astype(jnp.bfloat16).astype(jnp.float32)
    support = (xb @ wb).astype(jnp.bfloat16).astype(jnp.float32)
    ref = jnp.tanh(ab @ support)

    assert out.shape == (N, F_OUT)
    err = jnp.max(jnp.abs(out - ref))
    assert err < 2e-3, err

    print("KERNEL_OK")
</pallas_src>

<mosaic_0001>
module attributes {stable_mosaic.version = 11 : i64} {
  func.func @_support_kernel(%arg0: i32, %arg1: memref<1xi32, #tpu.memory_space<smem>>, %arg2: memref<32x128xbf16, #tpu.memory_space<vmem>>, %arg3: memref<128x128xbf16, #tpu.memory_space<vmem>>, %arg4: memref<32x128xbf16, #tpu.memory_space<vmem>>) attributes {dimension_semantics = [#tpu.dimension_semantics<parallel>], iteration_bounds = array<i64: 2>, scalar_prefetch = 1 : i64, scratch_operands = 0 : i64, tpu.core_type = #tpu.core_type<tc>, window_params = [{transform_indices = @transform_0, window_bounds = array<i64: 32, 128>}, {pipeline_mode = #tpu.pipeline_mode<synchronous>, transform_indices = @transform_1, window_bounds = array<i64: 128, 128>}, {transform_indices = @transform_2, window_bounds = array<i64: 32, 128>}]} {
    %c0 = arith.constant 0 : index
    %c0_0 = arith.constant 0 : index
    %0 = vector.load %arg2[%c0, %c0_0] : memref<32x128xbf16, #tpu.memory_space<vmem>>, vector<32x128xbf16>
    %c0_1 = arith.constant 0 : index
    %c0_2 = arith.constant 0 : index
    %1 = vector.load %arg3[%c0_1, %c0_2] : memref<128x128xbf16, #tpu.memory_space<vmem>>, vector<128x128xbf16>
    %cst = arith.constant dense<0.000000e+00> : vector<32x128xf32>
    %2 = tpu.matmul %0, %1, %cst {dimension_numbers = #tpu.dot_dimension_numbers<[1], [0], [0], [1], [0, 0, 1, 1], [], []>} : vector<32x128xbf16>, vector<128x128xbf16>, vector<32x128xf32> -> vector<32x128xf32>
    %3 = arith.truncf %2 : vector<32x128xf32> to vector<32x128xbf16>
    %c0_3 = arith.constant 0 : index
    %c0_4 = arith.constant 0 : index
    %4 = vector.load %arg4[%c0_3, %c0_4] : memref<32x128xbf16, #tpu.memory_space<vmem>>, vector<32x128xbf16>
    tpu.vector_store %arg4[%c0_3, %c0_4], %3 {strides = array<i32>} : memref<32x128xbf16, #tpu.memory_space<vmem>>, vector<32x128xbf16>,
    return
  }
  func.func @transform_0(%arg0: i32, %arg1: memref<1xi32, #tpu.memory_space<smem>>) -> (i32, i32) {
    %c0_i32 = arith.constant 0 : i32
    %c0_i32_0 = arith.constant 0 : i32
    return %arg0, %c0_i32 : i32, i32
  }
  func.func @transform_1(%arg0: i32, %arg1: memref<1xi32, #tpu.memory_space<smem>>) -> (i32, i32) {
    %c0_i32 = arith.constant 0 : i32
    %c0_i32_0 = arith.constant 0 : i32
    %c0_i32_1 = arith.constant 0 : i32
    return %c0_i32, %c0_i32_0 : i32, i32
  }
  func.func @transform_2(%arg0: i32, %arg1: memref<1xi32, #tpu.memory_space<smem>>) -> (i32, i32) {
    %c0_i32 = arith.constant 0 : i32
    %c0_i32_0 = arith.constant 0 : i32
    return %arg0, %c0_i32 : i32, i32
  }
}

</mosaic_0001>

<llo_original>
// kernel: tpu_custom_call.1
$region0: #{tpu_custom_call.1}
  #allocation0 [shape = 'u32[]', space=smem, size = 0x4, offset = 0x4, fixed_abs, tag = 'smem constant byte address 0x4 - core index']
  #allocation1 [shape = 'u32[144,128]{1,0:T(1,128)}', space=vmem, size = 0x12000, scoped, tag = 'internal scratch']
  #allocation2 [shape = 's32[1]{0}', space=sflag, size = 0x4, scoped, tag = 'scoped memory for tpu_custom_call.1']
  #allocation3 [shape = 's32[1]{0:T(128)S(6)}', space=smem, size = 0x200, scoped, tag = 'prefetched SMEM operand 0']
  %s0 = inlined_call_operand.<no memory space> [shape: s32[1], index: 0, kind: input, shape index: {}]
  %s1 = inlined_call_operand.hbm [shape: bf16[64,128], index: 1, kind: input, shape index: {}]
  %s2 = inlined_call_operand.hbm [shape: bf16[128,128], index: 2, kind: input, shape index: {}]
  %s3 = inlined_call_operand.hbm [shape: bf16[64,128], index: 3, kind: output, shape index: {}]
  %s4 = sld [smem:[#allocation0]]
  $region49: #{tpu_custom_call.1} parent=0
    _
  %s6 = ssub.s32 1, %s4
  %s7 = scalar_select 0, %s6, %s4
  %8 = sst [smem:[#allocation3]] %s0
  $region1: #{tpu_custom_call.1} parent=0
    #allocation4 [shape = 'u8[16384]{0}', space=vmem, size = 0x4000, scoped, tag = 'input window, operand 1']
    #allocation5 [shape = 's32[2]{0}', space=sflag, size = 0x8, scoped, tag = 'scoped memory for tpu_custom_call.1']
    #allocation6 [shape = 's32[2]{0}', space=sflag, size = 0x8, scoped, tag = 'scoped memory for tpu_custom_call.1']
    #allocation7 [shape = 'u8[32768]{0}', space=vmem, size = 0x8000, scoped, tag = 'input window, operand 2, single buffered']
    #allocation8 [shape = 's32[1]{0}', space=sflag, size = 0x4, scoped, tag = 'scoped memory for tpu_custom_call.1']
    #allocation9 [shape = 'u8[16384]{0}', space=vmem, size = 0x4000, scoped, tag = 'output window, operand 0']
    %9 = vsyncpa [#allocation5], 0
    %s10 = scalar_lea.sflag [#allocation5], 1
    %11 = vsyncpa %s10, 0
    %12 = vsyncpa [#allocation8], 0
    %13 = vsyncpa [#allocation6], 0
    %s14 = scalar_lea.sflag [#allocation6], 1
    %15 = vsyncpa %s14, 0
    loop: start=0, step=1, limit=4
    $region2: #{tpu_custom_call.1} parent=1 // loop_pre_header
      _
    $region3: #{tpu_custom_call.1} parent=1 // loop_header
      %s17 = sphi 0, %s21
      %p18 = scmp.ge.s32.totalorder %s17, 4
      %s27 = sphi 0, %s29
      %s30 = sphi 0, %s27
      %s31 = sphi 0, %s30
      %s47 = sphi 0, %s31
      %s51 = sphi 0, %s51
      %s53 = sphi 0, %s51
      %s54 = sphi 0, %s53
      %s68 = sphi 0, %s54
      %s74 = sphi 0, %s76
      %s77 = sphi 0, %s74
      %s78 = sphi 0, %s77
      %s94 = sphi 0, %s78
    $region4: #{tpu_custom_call.1} parent=1 // loop_header_branch
      %20 = sbr.rel (%p18) target = $region8
    $region5: #{tpu_custom_call.1} parent=1 // loop_body
      %s22 = ssub.s32 %s17, 1
      %s23 = ssub.s32 %s17, 2
      %s24 = sadd.s32 %s17, 1
      %s25 = ssub.s32 %s17, %s24
      %p26 = scmp.eq.s32.totalorder %s25, 0
      %s28 = sadd.s32 %s27, 1
      %s29 = scalar_select %p26, %s27, %s28
      %p32 = pneg %p26
      %p33 = scmp.eq.s32.totalorder %s17, 1
      %p34 = por %p32, %p33
      %p35 = scmp.ne.s32.totalorder %s27, %s30
      %p36 = scmp.eq.s32.totalorder %s17, 0
      %p37 = por %p35, %p36
      %p38 = scmp.ne.s32.totalorder %s27, %s30
      %p39 = scmp.eq.s32.totalorder %s22, 1
      %p40 = por %p38, %p39
      %p41 = scmp.ne.s32.totalorder %s30, %s31
      %p42 = scmp.eq.s32.totalorder %s22, 0
      %p43 = por %p41, %p42
      %p44 = scmp.ne.s32.totalorder %s30, %s31
      %p45 = scmp.eq.s32.totalorder %s23, 1
      %p46 = por %p44, %p45
      %p48 = scmp.ne.s32.totalorder %s31, %s47
      %p49 = scmp.eq.s32.totalorder %s23, 0
      %p50 = por %p48, %p49
      %s52 = sadd.s32 %s51, 1
      %p55 = scmp.eq.s32.totalorder %s17, 1
      %p56 = scmp.ne.s32.totalorder %s51, %s53
      %p57 = scmp.eq.s32.totalorder %s17, 0
      %p58 = por %p56, %p57
      %p59 = scmp.ne.s32.totalorder %s51, %s53
      %p60 = scmp.eq.s32.totalorder %s22, 1
      %p61 = por %p59, %p60
      %p62 = scmp.ne.s32.totalorder %s53, %s54
      %p63 = scmp.eq.s32.totalorder %s22, 0
      %p64 = por %p62, %p63
      %p65 = scmp.ne.s32.totalorder %s53, %s54
      %p66 = scmp.eq.s32.totalorder %s23, 1
      %p67 = por %p65, %p66
      %p69 = scmp.ne.s32.totalorder %s54, %s68
      %p70 = scmp.eq.s32.totalorder %s23, 0
      %p71 = por %p69, %p70
      %s72 = ssub.s32 %s17, %s24
      %p73 = scmp.eq.s32.totalorder %s72, 0
      %s75 = sadd.s32 %s74, 1
      %s76 = scalar_select %p73, %s74, %s75
      %p79 = pneg %p73
      %p80 = scmp.eq.s32.totalorder %s17, 1
      %p81 = por %p79, %p80
      %p82 = scmp.ne.s32.totalorder %s74, %s77
      %p83 = scmp.eq.s32.totalorder %s17, 0
      %p84 = por %p82, %p83
      %p85 = scmp.ne.s32.totalorder %s74, %s77
      %p86 = scmp.eq.s32.totalorder %s22, 1
      %p87 = por %p85, %p86
      %p88 = scmp.ne.s32.totalorder %s77, %s78
      %p89 = scmp.eq.s32.totalorder %s22, 0
      %p90 = por %p88, %p89
      %p91 = scmp.ne.s32.totalorder %s77, %s78
      %p92 = scmp.eq.s32.totalorder %s23, 1
      %p93 = por %p91, %p92
      %p95 = scmp.ne.s32.totalorder %s78, %s94
      %p96 = scmp.eq.s32.totalorder %s23, 0
      %p97 = por %p95, %p96
      %p98 = scmp.le.s32.totalorder 1, %s17
      %p99 = scmp.lt.s32.totalorder %s17, 3
      %p100 = pnand %p98, %p99
      %p101 = pneg %p100
      // Predicated region
      $region9: #{tpu_custom_call.1} parent=5 // pred_check
        _
      $region10: #{tpu_custom_call.1} parent=5 // pred_check_branch
        %103 = sbr.rel (%p100) target = $region12
      $region11: #{tpu_custom_call.1} parent=5 // pred_region
        %s104 = ssub.s32 %s17, 1
        // Predicated region
        $region13: #{tpu_custom_call.1} parent=11 // pred_check
          %p105 = pneg %p64
        $region14: #{tpu_custom_call.1} parent=11 // pred_check_branch
          %107 = sbr.rel (%p105) target = $region16
        $region15: #{tpu_custom_call.1} parent=11 // pred_region
          %s109 = ssub.s32 1024, 1024
          %110 = vsyncadd [#allocation8], %s109
          %s111 = sshll.u32 [#allocation7], 4
          %s112 = int_to_ptr.vmem [resolvable:$true] %s111
          %117 = dma.hbm_to_vmem [thread:$0]  %s2, 1024, %s112, [#allocation8], 64, 64, 4
        $region16: #{tpu_custom_call.1} parent=11 // pred_fallthru
          _
      $region12: #{tpu_custom_call.1} parent=5 // pred_fallthru
        _
      %p118 = scmp.lt.s32.totalorder %s17, 2
      // Predicated region
      $region17: #{tpu_custom_call.1} parent=5 // pred_check
        %p119 = pneg %p118
      $region18: #{tpu_custom_call.1} parent=5 // pred_check_branch
        %121 = sbr.rel (%p119) target = $region20
      $region19: #{tpu_custom_call.1} parent=5 // pred_region
        // Predicated region
        $region21: #{tpu_custom_call.1} parent=19 // pred_check
          %p122 = pneg %p37
        $region22: #{tpu_custom_call.1} parent=19 // pred_check_branch
          %124 = sbr.rel (%p122) target = $region24
        $region23: #{tpu_custom_call.1} parent=19 // pred_region
          %s125 = sand.u32 %s27, 1
          %s126 = scalar_lea.sflag [#allocation5], %s125
          %s127 = sand.u32 %s27, 1
          %s128 = smul.addr %s127, 16
          %s129 = scalar_lea.vmem [#allocation4], %s128
          %s130 = smul.u32 4, %s17
          %s132 = ssub.s32 256, 256
          %133 = vsyncadd %s126, %s132
          %s134 = smul.addr %s130, 64
          %s135 = scalar_lea.hbm %s1, %s134
          %s136 = sshll.u32 %s129, 4
          %s137 = int_to_ptr.vmem [resolvable:$true] %s136
          %142 = dma.hbm_to_vmem [thread:$0]  %s135, 256, %s137, %s126, 64, 64, 4
        $region24: #{tpu_custom_call.1} parent=19 // pred_fallthru
          _
      $region20: #{tpu_custom_call.1} parent=5 // pred_fallthru
        _
      %p143 = scmp.le.s32.totalorder 1, %s17
      %p144 = scmp.lt.s32.totalorder %s17, 3
      %p145 = pnand %p143, %p144
      %p146 = pneg %p145
      // Predicated region
      $region25: #{tpu_custom_call.1} parent=5 // pred_check
        _
      $region26: #{tpu_custom_call.1} parent=5 // pred_check_branch
        %148 = sbr.rel (%p145) target = $region28
      $region27: #{tpu_custom_call.1} parent=5 // pred_region
        %s149 = ssub.s32 %s17, 1
        %s150 = sand.u32 %s30, 1
        %s151 = scalar_lea.sflag [#allocation5], %s150
        %s152 = sand.u32 %s30, 1
        %s153 = smul.addr %s152, 16
        %s154 = scalar_lea.vmem [#allocation4], %s153
        // Predicated region
        $region29: #{tpu_custom_call.1} parent=27 // pred_check
          %p155 = pneg %p43
        $region30: #{tpu_custom_call.1} parent=27 // pred_check_branch
          %157 = sbr.rel (%p155) target = $region32
        $region31: #{tpu_custom_call.1} parent=27 // pred_region
          %158 = dma.done %s151, 256
        $region32: #{tpu_custom_call.1} parent=27 // pred_fallthru
          _
        // Predicated region
        $region33: #{tpu_custom_call.1} parent=27 // pred_check
          %p159 = pneg %p64
        $region34: #{tpu_custom_call.1} parent=27 // pred_check_branch
          %161 = sbr.rel (%p159) target = $region36
        $region35: #{tpu_custom_call.1} parent=27 // pred_region
          %162 = dma.done [#allocation8], 1024
        $region36: #{tpu_custom_call.1} parent=27 // pred_fallthru
          _
        %s163 = sand.u32 %s30, 1
        %s164 = scalar_lea.sflag [#allocation5], %s163
        %s165 = sand.u32 %s30, 1
        %s166 = smul.addr %s165, 16
        %s167 = scalar_lea.vmem [#allocation4], %s166
        %p168 = pneg %p43
        %p169 = pneg %p40
        %p170 = pneg %p64
        %p171 = pneg %p61
        %p172 = pneg %p90
        %p173 = pneg %p87
        %s174 = sand.u32 %s77, 1
        %s175 = scalar_lea.sflag [#allocation6], %s174
        %s176 = sand.u32 %s77, 1
        %s177 = smul.addr %s176, 16
        %s178 = scalar_lea.vmem [#allocation9], %s177
        %s179 = smul.u32 4, %s22
        %s180 = smul.u32 4, %s22
        %v182 = vld [vmem:[%s154] sm:$0xf]
        %v183 = vld [vmem:[%s154 + $0x4] sm:$0xf]
        %v184 = vld [vmem:[%s154 + $0x8] sm:$0xf]
        %v185 = vld [vmem:[%s154 + $0xc] sm:$0xf]
        %v186 = vld [vmem:[#allocation7] sm:$0xf]
        %v187 = vld [vmem:[#allocation7 + $0x4] sm:$0xf]
        %v188 = vld [vmem:[#allocation7 + $0x8] sm:$0xf]
        %v189 = vld [vmem:[#allocation7 + $0xc] sm:$0xf]
        %v190 = vld [vmem:[#allocation7 + $0x10] sm:$0xf]
        %v191 = vld [vmem:[#allocation7 + $0x14] sm:$0xf]
        %v192 = vld [vmem:[#allocation7 + $0x18] sm:$0xf]
        %v193 = vld [vmem:[#allocation7 + $0x1c] sm:$0xf]
        %v194 = vld [vmem:[#allocation7 + $0x20] sm:$0xf]
        %v195 = vld [vmem:[#allocation7 + $0x24] sm:$0xf]
        %v196 = vld [vmem:[#allocation7 + $0x28] sm:$0xf]
        %v197 = vld [vmem:[#allocation7 + $0x2c] sm:$0xf]
        %v198 = vld [vmem:[#allocation7 + $0x30] sm:$0xf]
        %v199 = vld [vmem:[#allocation7 + $0x34] sm:$0xf]
        %v200 = vld [vmem:[#allocation7 + $0x38] sm:$0xf]
        %v201 = vld [vmem:[#allocation7 + $0x3c] sm:$0xf]
        %v206 = vunpack.c.l.b16 %v182
        %v207 = vunpack.c.l.b16 %v183
        %v208 = vunpack.c.l.b16 %v184
        %v209 = vunpack.c.l.b16 %v185
        %v210 = vpack.c.b16 %v207, %v206
        %v211 = vpack.c.b16 %v209, %v208
        %v230 = vunpack.c.l.b16 %v186
        %v231 = vunpack.c.l.b16 %v187
        %v232 = vunpack.c.l.b16 %v188
        %v233 = vunpack.c.l.b16 %v189
        %v234 = vunpack.c.l.b16 %v190
        %v235 = vunpack.c.l.b16 %v191
        %v236 = vunpack.c.l.b16 %v192
        %v237 = vunpack.c.l.b16 %v193
        %v238 = vunpack.c.l.b16 %v194
        %v239 = vunpack.c.l.b16 %v195
        %v240 = vunpack.c.l.b16 %v196
        %v241 = vunpack.c.l.b16 %v197
        %v242 = vunpack.c.l.b16 %v198
        %v243 = vunpack.c.l.b16 %v199
        %v244 = vunpack.c.l.b16 %v200
        %v245 = vunpack.c.l.b16 %v201
        %v246 = vpack.c.b16 %v231, %v230
        %v247 = vpack.c.b16 %v233, %v232
        %v248 = vpack.c.b16 %v235, %v234
        %v249 = vpack.c.b16 %v237, %v236
        %v250 = vpack.c.b16 %v239, %v238
        %v251 = vpack.c.b16 %v241, %v240
        %v252 = vpack.c.b16 %v243, %v242
        %v253 = vpack.c.b16 %v245, %v244
        %262 = vmatprep.subr.bf16.mxu0 0
        %263 = vmatpush1.bf16.msra.mxu0 %v253
        %264 = vmatprep.subr.bf16.mxu0 0
        %265 = vmatpush1.bf16.msra.mxu0 %v252
        %266 = vmatprep.subr.bf16.mxu0 0
        %267 = vmatpush1.bf16.msra.mxu0 %v251
        %268 = vmatprep.subr.bf16.mxu0 0
        %269 = vmatpush1.bf16.msra.mxu0 %v250
        %270 = vmatprep.subr.bf16.mxu0 0
        %271 = vmatpush1.bf16.msra.mxu0 %v249
        %272 = vmatprep.subr.bf16.mxu0 0
        %273 = vmatpush1.bf16.msra.mxu0 %v248
        %274 = vmatprep.subr.bf16.mxu0 0
        %275 = vmatpush1.bf16.msra.mxu0 %v247
        %276 = vmatprep.subr.bf16.mxu0 0
        %277 = vmatpush1.bf16.msra.mxu0 %v246
        %278 = vmatprep.subr.bf16.mxu0 0
        %279 = vmatpush2.bf16.msra.mxu0 0
        %280 = vmatprep.subr.bf16.mxu0 0
        %281 = vmatpush2.bf16.msra.mxu0 0
        %282 = vmatprep.subr.bf16.mxu0 0
        %283 = vmatpush2.bf16.msra.mxu0 0
        %284 = vmatprep.subr.bf16.mxu0 0
        %285 = vmatpush2.bf16.msra.mxu0 0
        %286 = vmatprep.subr.bf16.mxu0 0
        %287 = vmatpush2.bf16.msra.mxu0 0
        %288 = vmatprep.subr.bf16.mxu0 0
        %289 = vmatpush2.bf16.msra.mxu0 0
        %290 = vmatprep.subr.bf16.mxu0 0
        %291 = vmatpush2.bf16.msra.mxu0 0
        %292 = vmatprep.subr.bf16.mxu0 0
        %293 = vmatpush2.bf16.msra.mxu0 0
        %294 = vmatprep.mubr.bf16.mxu0 0
        %295 = vmatmul.mubr.bf16.gmra.mxu0 %v210
        %v296 = vpop.f32.mrf.mxu0
        %v297 = vadd.f32 0.0, %v296
        %v298 = vpop.f32.mrf.mxu0
        %v299 = vpop.f32.mrf.mxu0
        %v300 = vadd.f32 0.0, %v299
        %v301 = vpop.f32.mrf.mxu0
        %302 = vmatprep.mubr.bf16.mxu0 0
        %303 = vmatmul.mubr.bf16.gmra.mxu0 %v211
        %v304 = vpop.f32.mrf.mxu0
        %v305 = vadd.f32 0.0, %v304
        %v306 = vpop.f32.mrf.mxu0
        %v307 = vpop.f32.mrf.mxu0
        %v308 = vadd.f32 0.0, %v307
        %v309 = vpop.f32.mrf.mxu0
        %310 = vdwg.mxu0
        %v311 = vpack.c.bf16 %v300, %v297
        %v312 = vpack.c.bf16 %v308, %v305
        %v315 = vunpack.c.l.b16 %v311
        %v316 = vunpack.c.h.b16 %v311
        %v317 = vunpack.c.l.b16 %v312
        %v318 = vunpack.c.h.b16 %v312
        %v319 = vpack.c.b16 %v315, %v315
        %v320 = vpack.c.b16 %v316, %v316
        %v321 = vpack.c.b16 %v317, %v317
        %v322 = vpack.c.b16 %v318, %v318
        %327 = vst [vmem:[%s178] sm:$0xf] %v319
        %328 = vst [vmem:[%s178 + $0x4] sm:$0xf] %v320
        %329 = vst [vmem:[%s178 + $0x8] sm:$0xf] %v321
        %330 = vst [vmem:[%s178 + $0xc] sm:$0xf] %v322
        %s331 = sand.u32 %s77, 1
        %s332 = scalar_lea.sflag [#allocation6], %s331
        %s333 = sand.u32 %s77, 1
        %s334 = smul.addr %s333, 16
        %s335 = scalar_lea.vmem [#allocation9], %s334
        // Predicated region
        $region37: #{tpu_custom_call.1} parent=27 // pred_check
          %p336 = pneg %p87
        $region38: #{tpu_custom_call.1} parent=27 // pred_check_branch
          %338 = sbr.rel (%p336) target = $region40
        $region39: #{tpu_custom_call.1} parent=27 // pred_region
          %s339 = smul.u32 4, %s22
          %s341 = ssub.s32 256, 256
          %342 = vsyncadd %s332, %s341
          %s343 = smul.addr %s339, 64
          %s344 = scalar_lea.hbm %s3, %s343
          %s345 = sshll.u32 %s335, 4
          %s346 = int_to_ptr.vmem [resolvable:$true] %s345
          %351 = dma.vmem_to_hbm [thread:$0]  %s346, 256, %s344, %s332, 64, 64, 4
        $region40: #{tpu_custom_call.1} parent=27 // pred_fallthru
          _
      $region28: #{tpu_custom_call.1} parent=5 // pred_fallthru
        _
      %p352 = scmp.le.s32.totalorder 2, %s17
      // Predicated region
      $region41: #{tpu_custom_call.1} parent=5 // pred_check
        %p353 = pneg %p352
      $region42: #{tpu_custom_call.1} parent=5 // pred_check_branch
        %355 = sbr.rel (%p353) target = $region44
      $region43: #{tpu_custom_call.1} parent=5 // pred_region
        %s356 = ssub.s32 %s17, 2
        // Predicated region
        $region45: #{tpu_custom_call.1} parent=43 // pred_check
          %p357 = pneg %p93
        $region46: #{tpu_custom_call.1} parent=43 // pred_check_branch
          %359 = sbr.rel (%p357) target = $region48
        $region47: #{tpu_custom_call.1} parent=43 // pred_region
          %s360 = sand.u32 %s78, 1
          %s361 = scalar_lea.sflag [#allocation6], %s360
          %s362 = sand.u32 %s78, 1
          %s363 = smul.addr %s362, 16
          %s364 = scalar_lea.vmem [#allocation9], %s363
          %365 = dma.done %s361, 256
        $region48: #{tpu_custom_call.1} parent=43 // pred_fallthru
          _
      $region44: #{tpu_custom_call.1} parent=5 // pred_fallthru
        _
    $region6: #{tpu_custom_call.1} parent=1 // loop_footer
      %s21 = sadd.s32 1, %s17
    $region7: #{tpu_custom_call.1} parent=1 // loop_footer_branch
      %16 = sbr.rel target = $region3
    $region8: #{tpu_custom_call.1} parent=1 // loop_exit
      _
    %366 = vsyncpa [#allocation5], 1
    %s367 = scalar_lea.sflag [#allocation5], 1
    %368 = vsyncpa %s367, 1
    %369 = vsyncpa [#allocation8], 1
    %370 = vsyncpa [#allocation6], 1
    %s371 = scalar_lea.sflag [#allocation6], 1
    %372 = vsyncpa %s371, 1

</llo_original>
